<compile_context>
chip_gen: v6e
topology: v6e:2x2x1
jax: 0.10.0
libtpu: 0.0.40
codegen_flags: <defaults>
</compile_context>

<pallas_src>
import functools

import jax
import jax.numpy as jnp
from jax import lax
from jax.experimental import pallas as pl
from jax.experimental.pallas import tpu as pltpu

LANE = 128
MAX_BLOCK_ROWS = 8192        # 8192 * 128 * 4 B = 4 MiB per f32 input tile
CHUNK_ROWS = 512             # inner accumulation chunk; divides MAX_BLOCK_ROWS
VMEM_LIMIT_BYTES = 40 << 20  # safe on v5e/v6e (128 MiB) and v7x (64 MiB physical)


def _partials_kernel(x_ref, t_ref,
                     pos_cnt_ref, neg_cnt_ref, pos_sum_ref, neg_sum_ref,
                     *, chunk_rows, n_chunks):
    """One grid step: per-block partial sums over a (block_rows, 128) tile.

    x_ref, t_ref : (block_rows, 128) in native dtype (cast to f32 in-kernel)
    *_ref outputs: (1, 8, 128) f32 per-block partial accumulators
    """

    def chunk_body(c, carry):
        pc, nc, ps, ns = carry
        r0 = pl.multiple_of(c * chunk_rows, 8)
        x = x_ref[pl.ds(r0, chunk_rows), :].astype(jnp.float32)
        t = t_ref[pl.ds(r0, chunk_rows), :].astype(jnp.float32)

        pos = t == 1.0
        neg = t == 0.0
        # Numerically stable BCE-with-logits (same formula PyTorch uses):
        #   max(x, 0) - x*t + log(1 + exp(-|x|))
        elem = jnp.maximum(x, 0.0) - x * t + jnp.log1p(jnp.exp(-jnp.abs(x)))

        zero = jnp.zeros_like(elem)

        def sub_reduce(v):
            # (chunk, 128) -> (chunk//8, 8, 128), reduce axis 0: pure vreg adds,
            # no cross-sublane (XLU) work inside the hot loop.
            return jnp.sum(v.reshape(chunk_rows // 8, 8, LANE), axis=0)

        pc = pc + sub_reduce(pos.astype(jnp.float32))
        nc = nc + sub_reduce(neg.astype(jnp.float32))
        ps = ps + sub_reduce(jnp.where(pos, elem, zero))
        ns = ns + sub_reduce(jnp.where(neg, elem, zero))
        return pc, nc, ps, ns

    zeros = jnp.zeros((8, LANE), jnp.float32)
    pc, nc, ps, ns = lax.fori_loop(0, n_chunks, chunk_body,
                                   (zeros, zeros, zeros, zeros))

    pos_cnt_ref[...] = pc[None]
    neg_cnt_ref[...] = nc[None]
    pos_sum_ref[...] = ps[None]
    neg_sum_ref[...] = ns[None]


def _run_partials(x2, t2, num_blocks, block_rows, chunk_rows):
    """Run the kernel over `num_blocks` (block_rows, 128) tiles of x2/t2.

    Rows of x2/t2 beyond num_blocks*block_rows are simply never visited.
    Returns 4 f32 scalars: (pos_cnt, neg_cnt, pos_sum, neg_sum).
    """
    kernel = functools.partial(_partials_kernel,
                               chunk_rows=chunk_rows,
                               n_chunks=block_rows // chunk_rows)
    outs = pl.pallas_call(
        kernel,
        out_shape=[jax.ShapeDtypeStruct((num_blocks, 8, LANE), jnp.float32)
                   for _ in range(4)],
        grid=(num_blocks,),
        in_specs=[pl.BlockSpec((block_rows, LANE), lambda i: (i, 0)),
                  pl.BlockSpec((block_rows, LANE), lambda i: (i, 0))],
        out_specs=[pl.BlockSpec((1, 8, LANE), lambda i: (i, 0, 0))
                   for _ in range(4)],
        compiler_params=pltpu.CompilerParams(
            dimension_semantics=("parallel",),      # megacore on v7x
            vmem_limit_bytes=VMEM_LIMIT_BYTES),
    )(x2, t2)
    return tuple(jnp.sum(o) for o in outs)


def _pick_chunk(block_rows, target=CHUNK_ROWS):
    """Largest multiple of 8 that divides block_rows and is <= target."""
    best = 8
    for d in range(8, min(block_rows, target) + 1, 8):
        if block_rows % d == 0:
            best = d
    return best


def _flat_partials(x_flat, t_flat):
    """Partial sums (pos_cnt, neg_cnt, pos_sum, neg_sum) for flat slabs."""
    n = x_flat.shape[0]
    rows = -(-n // LANE)  # cdiv

    if rows <= MAX_BLOCK_ROWS:
        # Single-block path (also used for the remainder of large inputs).
        block_rows = max(8, ((rows + 7) // 8) * 8)
        padded = block_rows * LANE
        if padded != n:
            # Sentinel padding: a target of -1 is neither class, so padded
            # elements get zero weight automatically (no in-kernel mask).
            t_flat = t_flat.astype(jnp.float32)
            x_flat = jnp.pad(x_flat, (0, padded - n))
            t_flat = jnp.pad(t_flat, (0, padded - n), constant_values=-1.0)
        chunk = _pick_chunk(block_rows)
        return _run_partials(x_flat.reshape(block_rows, LANE),
                             t_flat.reshape(block_rows, LANE),
                             1, block_rows, chunk)

    # Large input: run full (MAX_BLOCK_ROWS, 128) blocks over the bulk with no
    # padding copy (the grid just does not visit the trailing rows); the small
    # remainder (< one block) is handled by a recursive single-block call and
    # the partial sums are added outside the kernel.
    rows_full = n // LANE
    num_blocks = rows_full // MAX_BLOCK_ROWS          # >= 1 here
    covered = num_blocks * MAX_BLOCK_ROWS * LANE
    full_len = rows_full * LANE
    if full_len != n:
        # TODO(synk): large inputs whose size is not a multiple of 128 pay one
        # HBM slice copy here; a strided 1-D BlockSpec could avoid it.
        xb, tb = x_flat[:full_len], t_flat[:full_len]
    else:
        xb, tb = x_flat, t_flat
    bulk = _run_partials(xb.reshape(rows_full, LANE),
                         tb.reshape(rows_full, LANE),
                         num_blocks, MAX_BLOCK_ROWS, CHUNK_ROWS)
    if covered == n:
        return bulk
    rem = _flat_partials(x_flat[covered:], t_flat[covered:])
    return tuple(a + b for a, b in zip(bulk, rem))


def balanced_loss(logits, target, neg_weight=1.0):
    """Pallas implementation of BalancedLoss.forward (reduction='sum')."""
    assert logits.shape == target.shape
    pos_num, neg_num, pos_sum, neg_sum = _flat_partials(
        jnp.ravel(logits), jnp.ravel(target))

    # Per-element weights: 1/pos_num for positives, neg_weight/neg_num for
    # negatives, 0 otherwise; weight.sum() = pos_num*pos_w + neg_num*neg_w.
    # The guards reproduce PyTorch's behavior exactly: an empty class never has
    # its (inf) weight applied, and both-empty yields 0/0 = NaN just like the
    # reference module.
    neg_weight = jnp.float32(neg_weight)
    pos_w = jnp.where(pos_num > 0.0, 1.0 / jnp.maximum(pos_num, 1.0), 0.0)
    neg_w = jnp.where(neg_num > 0.0, neg_weight / jnp.maximum(neg_num, 1.0), 0.0)
    w_sum = pos_num * pos_w + neg_num * neg_w
    return (pos_w * pos_sum + neg_w * neg_sum) / w_sum


def _reference_loss(x, t, neg_weight=1.0):
    """Pure-JAX reference mirroring the PyTorch module, for verification."""
    x = x.astype(jnp.float32)
    t = t.astype(jnp.float32)
    pos = t == 1.0
    neg = t == 0.0
    pos_num = jnp.sum(pos).astype(jnp.float32)
    neg_num = jnp.sum(neg).astype(jnp.float32)
    w = jnp.where(pos, 1.0 / pos_num, 0.0)
    w = jnp.where(neg, neg_weight / neg_num, w)
    w = w / jnp.sum(w)
    elem = jnp.maximum(x, 0.0) - x * t + jnp.log1p(jnp.exp(-jnp.abs(x)))
    return jnp.sum(w * elem)


def _check(shape, neg_weight, key):
    k1, k2 = jax.random.split(key)
    logits = jax.random.normal(k1, shape, dtype=jnp.float32)
    target = (jax.random.uniform(k2, shape) > 0.5).astype(jnp.float32)  # {0, 1}
    loss = jax.block_until_ready(balanced_loss(logits, target, neg_weight))
    ref = jax.block_until_ready(_reference_loss(logits, target, neg_weight))
    assert jnp.allclose(loss, ref, rtol=1e-4, atol=1e-5), (shape, loss, ref)


if __name__ == "__main__":
    key = jax.random.PRNGKey(0)
    k0, k1, k2, k3 = jax.random.split(key, 4)

    # Primary: small NCHW shape consistent with the module (single block).
    _check((2, 4, 16, 16), neg_weight=1.0, key=k0)
    # Multi-block "parallel" grid path (rows > MAX_BLOCK_ROWS), no remainder.
    _check((2, 16, 256, 256), neg_weight=0.5, key=k1)
    # Ragged small size: exercises sentinel padding (no in-kernel mask).
    _check((2, 3, 17, 19), neg_weight=2.0, key=k2)
    # Large ragged: bulk grid + recursive single-block remainder combine.
    _check((1, 1, 8219, 131), neg_weight=0.7, key=k3)

    print("KERNEL_OK")
</pallas_src>

<mosaic_0001>
module attributes {stable_mosaic.version = 11 : i64} {
  func.func @_partials_kernel(%arg0: i32, %arg1: memref<16x128xf32, #tpu.memory_space<vmem>>, %arg2: memref<16x128xf32, #tpu.memory_space<vmem>>, %arg3: memref<1x8x128xf32, #tpu.memory_space<vmem>>, %arg4: memref<1x8x128xf32, #tpu.memory_space<vmem>>, %arg5: memref<1x8x128xf32, #tpu.memory_space<vmem>>, %arg6: memref<1x8x128xf32, #tpu.memory_space<vmem>>) attributes {dimension_semantics = [#tpu.dimension_semantics<parallel>], iteration_bounds = array<i64: 1>, scalar_prefetch = 0 : i64, scratch_operands = 0 : i64, tpu.core_type = #tpu.core_type<tc>, window_params = [{transform_indices = @transform_0, window_bounds = array<i64: 16, 128>}, {transform_indices = @transform_1, window_bounds = array<i64: 16, 128>}, {transform_indices = @transform_2, window_bounds = array<i64: 1, 8, 128>}, {transform_indices = @transform_3, window_bounds = array<i64: 1, 8, 128>}, {transform_indices = @transform_4, window_bounds = array<i64: 1, 8, 128>}, {transform_indices = @transform_5, window_bounds = array<i64: 1, 8, 128>}]} {
    %cst = arith.constant 0.000000e+00 : f32
    %0 = vector.broadcast %cst : f32 to vector<8x128xf32>
    %c0_i32 = arith.constant 0 : i32
    %c16_i32 = arith.constant 16 : i32
    %1 = arith.muli %c0_i32, %c16_i32 : i32
    %2 = tpu.assume_multiple %1, 8 : i32
    %3 = arith.index_cast %2 : i32 to index
    %c0 = arith.constant 0 : index
    %4 = vector.load %arg1[%3, %c0] : memref<16x128xf32, #tpu.memory_space<vmem>>, vector<16x128xf32>
    %5 = arith.index_cast %2 : i32 to index
    %c0_0 = arith.constant 0 : index
    %6 = vector.load %arg2[%5, %c0_0] : memref<16x128xf32, #tpu.memory_space<vmem>>, vector<16x128xf32>
    %cst_1 = arith.constant 1.000000e+00 : f32
    %7 = vector.broadcast %cst_1 : f32 to vector<16x128xf32>
    %8 = arith.cmpf oeq, %6, %7 : vector<16x128xf32>
    %cst_2 = arith.constant 0.000000e+00 : f32
    %9 = vector.broadcast %cst_2 : f32 to vector<16x128xf32>
    %10 = arith.cmpf oeq, %6, %9 : vector<16x128xf32>
    %cst_3 = arith.constant 0.000000e+00 : f32
    %11 = vector.broadcast %cst_3 : f32 to vector<16x128xf32>
    %12 = arith.maximumf %4, %11 : vector<16x128xf32>
    %13 = arith.mulf %4, %6 : vector<16x128xf32>
    %14 = arith.subf %12, %13 : vector<16x128xf32>
    %15 = math.absf %4 : vector<16x128xf32>
    %cst_4 = arith.constant 0.000000e+00 : f32
    %16 = vector.broadcast %cst_4 : f32 to vector<16x128xf32>
    %17 = arith.subf %16, %15 : vector<16x128xf32>
    %18 = math.exp %17 : vector<16x128xf32>
    %19 = math.log1p %18 : vector<16x128xf32>
    %20 = arith.addf %14, %19 : vector<16x128xf32>
    %cst_5 = arith.constant 0.000000e+00 : f32
    %21 = vector.broadcast %cst_5 : f32 to vector<16x128xf32>
    %22 = arith.extui %8 : vector<16x128xi1> to vector<16x128xi32>
    %23 = arith.sitofp %22 : vector<16x128xi32> to vector<16x128xf32>
    %24 = vector.shape_cast %23 : vector<16x128xf32> to vector<2x8x128xf32>
    %cst_6 = arith.constant dense<0.000000e+00> : vector<8x128xf32>
    %25 = vector.multi_reduction <add>, %24, %cst_6 [0] : vector<2x8x128xf32> to vector<8x128xf32>
    %26 = arith.addf %0, %25 : vector<8x128xf32>
    %27 = arith.extui %10 : vector<16x128xi1> to vector<16x128xi32>
    %28 = arith.sitofp %27 : vector<16x128xi32> to vector<16x128xf32>
    %29 = vector.shape_cast %28 : vector<16x128xf32> to vector<2x8x128xf32>
    %cst_7 = arith.constant dense<0.000000e+00> : vector<8x128xf32>
    %30 = vector.multi_reduction <add>, %29, %cst_7 [0] : vector<2x8x128xf32> to vector<8x128xf32>
    %31 = arith.addf %0, %30 : vector<8x128xf32>
    %32 = arith.select %8, %20, %21 : vector<16x128xi1>, vector<16x128xf32>
    %33 = vector.shape_cast %32 : vector<16x128xf32> to vector<2x8x128xf32>
    %cst_8 = arith.constant dense<0.000000e+00> : vector<8x128xf32>
    %34 = vector.multi_reduction <add>, %33, %cst_8 [0] : vector<2x8x128xf32> to vector<8x128xf32>
    %35 = arith.addf %0, %34 : vector<8x128xf32>
    %36 = arith.select %10, %20, %21 : vector<16x128xi1>, vector<16x128xf32>
    %37 = vector.shape_cast %36 : vector<16x128xf32> to vector<2x8x128xf32>
    %cst_9 = arith.constant dense<0.000000e+00> : vector<8x128xf32>
    %38 = vector.multi_reduction <add>, %37, %cst_9 [0] : vector<2x8x128xf32> to vector<8x128xf32>
    %39 = arith.addf %0, %38 : vector<8x128xf32>
    %c1_i32 = arith.constant 1 : i32
    %40 = vector.shape_cast %26 : vector<8x128xf32> to vector<1x8x128xf32>
    %c0_10 = arith.constant 0 : index
    %c0_11 = arith.constant 0 : index
    %c0_12 = arith.constant 0 : index
    %41 = vector.load %arg3[%c0_10, %c0_11, %c0_12] : memref<1x8x128xf32, #tpu.memory_space<vmem>>, vector<1x8x128xf32>
    tpu.vector_store %arg3[%c0_10, %c0_11, %c0_12], %40 {strides = array<i32>} : memref<1x8x128xf32, #tpu.memory_space<vmem>>, vector<1x8x128xf32>,
    %42 = vector.shape_cast %31 : vector<8x128xf32> to vector<1x8x128xf32>
    %c0_13 = arith.constant 0 : index
    %c0_14 = arith.constant 0 : index
    %c0_15 = arith.constant 0 : index
    %43 = vector.load %arg4[%c0_13, %c0_14, %c0_15] : memref<1x8x128xf32, #tpu.memory_space<vmem>>, vector<1x8x128xf32>
    tpu.vector_store %arg4[%c0_13, %c0_14, %c0_15], %42 {strides = array<i32>} : memref<1x8x128xf32, #tpu.memory_space<vmem>>, vector<1x8x128xf32>,
    %44 = vector.shape_cast %35 : vector<8x128xf32> to vector<1x8x128xf32>
    %c0_16 = arith.constant 0 : index
    %c0_17 = arith.constant 0 : index
    %c0_18 = arith.constant 0 : index
    %45 = vector.load %arg5[%c0_16, %c0_17, %c0_18] : memref<1x8x128xf32, #tpu.memory_space<vmem>>, vector<1x8x128xf32>
    tpu.vector_store %arg5[%c0_16, %c0_17, %c0_18], %44 {strides = array<i32>} : memref<1x8x128xf32, #tpu.memory_space<vmem>>, vector<1x8x128xf32>,
    %46 = vector.shape_cast %39 : vector<8x128xf32> to vector<1x8x128xf32>
    %c0_19 = arith.constant 0 : index
    %c0_20 = arith.constant 0 : index
    %c0_21 = arith.constant 0 : index
    %47 = vector.load %arg6[%c0_19, %c0_20, %c0_21] : memref<1x8x128xf32, #tpu.memory_space<vmem>>, vector<1x8x128xf32>
    tpu.vector_store %arg6[%c0_19, %c0_20, %c0_21], %46 {strides = array<i32>} : memref<1x8x128xf32, #tpu.memory_space<vmem>>, vector<1x8x128xf32>,
    return
  }
  func.func @transform_0(%arg0: i32) -> (i32, i32) {
    %c0_i32 = arith.constant 0 : i32
    %c0_i32_0 = arith.constant 0 : i32
    return %arg0, %c0_i32 : i32, i32
  }
  func.func @transform_1(%arg0: i32) -> (i32, i32) {
    %c0_i32 = arith.constant 0 : i32
    %c0_i32_0 = arith.constant 0 : i32
    return %arg0, %c0_i32 : i32, i32
  }
  func.func @transform_2(%arg0: i32) -> (i32, i32, i32) {
    %c0_i32 = arith.constant 0 : i32
    %c0_i32_0 = arith.constant 0 : i32
    %c0_i32_1 = arith.constant 0 : i32
    return %arg0, %c0_i32, %c0_i32_0 : i32, i32, i32
  }
  func.func @transform_3(%arg0: i32) -> (i32, i32, i32) {
    %c0_i32 = arith.constant 0 : i32
    %c0_i32_0 = arith.constant 0 : i32
    %c0_i32_1 = arith.constant 0 : i32
    return %arg0, %c0_i32, %c0_i32_0 : i32, i32, i32
  }
  func.func @transform_4(%arg0: i32) -> (i32, i32, i32) {
    %c0_i32 = arith.constant 0 : i32
    %c0_i32_0 = arith.constant 0 : i32
    %c0_i32_1 = arith.constant 0 : i32
    return %arg0, %c0_i32, %c0_i32_0 : i32, i32, i32
  }
  func.func @transform_5(%arg0: i32) -> (i32, i32, i32) {
    %c0_i32 = arith.constant 0 : i32
    %c0_i32_0 = arith.constant 0 : i32
    %c0_i32_1 = arith.constant 0 : i32
    return %arg0, %c0_i32, %c0_i32_0 : i32, i32, i32
  }
}

</mosaic_0001>

<llo_original>
// kernel: tpu_custom_call.1
$region0: #{tpu_custom_call.1}
  #allocation0 [shape = 'u32[]', space=smem, size = 0x4, offset = 0x4, fixed_abs, tag = 'smem constant byte address 0x4 - core index']
  #allocation1 [shape = 'u32[144,128]{1,0:T(1,128)}', space=vmem, size = 0x12000, scoped, tag = 'internal scratch']
  %s0 = inlined_call_operand.hbm [shape: f32[16,128], index: 0, kind: input, shape index: {}]
  %s1 = inlined_call_operand.hbm [shape: f32[16,128], index: 1, kind: input, shape index: {}]
  %s2 = inlined_call_operand.hbm [shape: f32[1,8,128], index: 2, kind: output, shape index: {0}]
  %s3 = inlined_call_operand.hbm [shape: f32[1,8,128], index: 3, kind: output, shape index: {1}]
  %s4 = inlined_call_operand.hbm [shape: f32[1,8,128], index: 4, kind: output, shape index: {2}]
  %s5 = inlined_call_operand.hbm [shape: f32[1,8,128], index: 5, kind: output, shape index: {3}]
  %6 = xla_tuple %s2, %s3, %s4, %s5
  %s7 = sld [smem:[#allocation0]]
  $region50: #{tpu_custom_call.1} parent=0
    _
  %s9 = ssub.s32 1, %s7
  %s10 = scalar_select 0, %s9, %s7
  $region1: #{tpu_custom_call.1} parent=0
    #allocation2 [shape = 'u8[8192]{0}', space=vmem, size = 0x2000, scoped, tag = 'input window, operand 0, single buffered']
    #allocation3 [shape = 's32[1]{0}', space=sflag, size = 0x4, scoped, tag = 'scoped memory for tpu_custom_call.1']
    #allocation4 [shape = 's32[1]{0}', space=sflag, size = 0x4, scoped, tag = 'scoped memory for tpu_custom_call.1']
    #allocation5 [shape = 'u8[8192]{0}', space=vmem, size = 0x2000, scoped, tag = 'input window, operand 1, single buffered']
    #allocation6 [shape = 's32[1]{0}', space=sflag, size = 0x4, scoped, tag = 'scoped memory for tpu_custom_call.1']
    #allocation7 [shape = 'u8[4096]{0}', space=vmem, size = 0x1000, scoped, tag = 'output window, operand 0, single buffered']
    #allocation8 [shape = 'u8[4096]{0}', space=vmem, size = 0x1000, scoped, tag = 'output window, operand 1, single buffered']
    #allocation9 [shape = 's32[1]{0}', space=sflag, size = 0x4, scoped, tag = 'scoped memory for tpu_custom_call.1']
    #allocation10 [shape = 'u8[4096]{0}', space=vmem, size = 0x1000, scoped, tag = 'output window, operand 2, single buffered']
    #allocation11 [shape = 'u8[4096]{0}', space=vmem, size = 0x1000, scoped, tag = 'output window, operand 3, single buffered']
    #allocation12 [shape = 's32[1]{0}', space=sflag, size = 0x4, scoped, tag = 'scoped memory for tpu_custom_call.1']
    %11 = vsyncpa [#allocation3], 0
    %12 = vsyncpa [#allocation6], 0
    %13 = vsyncpa [#allocation4], 0
    %14 = vsyncpa [#allocation9], 0
    %15 = vsyncpa [#allocation12], 0
    // Predicated region
    $region2: #{tpu_custom_call.1} parent=1 // pred_check
      _
    $region3: #{tpu_custom_call.1} parent=1 // pred_check_branch
      %17 = sbr.rel (0) target = $region5
    $region4: #{tpu_custom_call.1} parent=1 // pred_region
      %s19 = ssub.s32 256, 256
      %20 = vsyncadd [#allocation3], %s19
      %s21 = sshll.u32 [#allocation2], 4
      %s22 = int_to_ptr.vmem [resolvable:$true] %s21
      %27 = dma.hbm_to_vmem [thread:$0]  %s0, 256, %s22, [#allocation3], 128, 128, 8
    $region5: #{tpu_custom_call.1} parent=1 // pred_fallthru
      _
    // Predicated region
    $region6: #{tpu_custom_call.1} parent=1 // pred_check
      _
    $region7: #{tpu_custom_call.1} parent=1 // pred_check_branch
      %29 = sbr.rel (0) target = $region9
    $region8: #{tpu_custom_call.1} parent=1 // pred_region
      %s31 = ssub.s32 256, 256
      %32 = vsyncadd [#allocation6], %s31
      %s33 = sshll.u32 [#allocation5], 4
      %s34 = int_to_ptr.vmem [resolvable:$true] %s33
      %39 = dma.hbm_to_vmem [thread:$0]  %s1, 256, %s34, [#allocation6], 128, 128, 8
    $region9: #{tpu_custom_call.1} parent=1 // pred_fallthru
      _
    // Predicated region
    $region10: #{tpu_custom_call.1} parent=1 // pred_check
      _
    $region11: #{tpu_custom_call.1} parent=1 // pred_check_branch
      %41 = sbr.rel (0) target = $region13
    $region12: #{tpu_custom_call.1} parent=1 // pred_region
      %42 = dma.done [#allocation3], 256
    $region13: #{tpu_custom_call.1} parent=1 // pred_fallthru
      _
    // Predicated region
    $region14: #{tpu_custom_call.1} parent=1 // pred_check
      _
    $region15: #{tpu_custom_call.1} parent=1 // pred_check_branch
      %44 = sbr.rel (0) target = $region17
    $region16: #{tpu_custom_call.1} parent=1 // pred_region
      %45 = dma.done [#allocation6], 256
    $region17: #{tpu_custom_call.1} parent=1 // pred_fallthru
      _
    %v46 = vld [vmem:[#allocation2] sm:$0xff]
    %v47 = vld [vmem:[#allocation2 + $0x8] sm:$0xff]
    %v48 = vld [vmem:[#allocation5] sm:$0xff]
    %v49 = vld [vmem:[#allocation5 + $0x8] sm:$0xff]
    %vm50 = vcmp.eq.f32.partialorder %v48, 1.0
    %vm51 = vcmp.eq.f32.partialorder %v49, 1.0
    %vm52 = vcmp.eq.f32.partialorder %v48, 0.0
    %vm53 = vcmp.eq.f32.partialorder %v49, 0.0
    %v54 = vmax.f32 %v46, 0.0
    %v55 = vmax.f32 %v47, 0.0
    %v56 = vmul.f32 %v46, %v48
    %v57 = vmul.f32 %v47, %v49
    %v58 = vsub.f32 %v54, %v56
    %v59 = vsub.f32 %v55, %v57
    %v60 = vand.u32 2147483647, %v46
    %v61 = vand.u32 2147483647, %v47
    %v62 = vsub.f32 0.0, %v60
    %v63 = vsub.f32 0.0, %v61
    %v64 = vmul.f32 %v62, 1.442695
    %v65 = vpow.pop %v64
    %v66 = vmul.f32 %v63, 1.442695
    %v67 = vpow.pop %v66
    %v68 = vadd.f32 %v65, 1.0
    %v69 = vlog2.pop %v68
    %v70 = vmul.f32 %v69, 0.6931472
    %v71 = vmul.f32 -0.5, %v65
    %v72 = vadd.f32 %v71, 1.0
    %v73 = vmul.f32 %v72, %v65
    %v74 = vand.u32 2147483647, %v65
    %vm75 = vcmp.lt.f32.partialorder %v74, 0.0004427343
    %v76 = vsel %vm75, %v73, %v70
    %v77 = vadd.f32 %v67, 1.0
    %v78 = vlog2.pop %v77
    %v79 = vmul.f32 %v78, 0.6931472
    %v80 = vmul.f32 -0.5, %v67
    %v81 = vadd.f32 %v80, 1.0
    %v82 = vmul.f32 %v81, %v67
    %v83 = vand.u32 2147483647, %v67
    %vm84 = vcmp.lt.f32.partialorder %v83, 0.0004427343
    %v85 = vsel %vm84, %v82, %v79
    %v86 = vadd.f32 %v58, %v76
    %v87 = vadd.f32 %v59, %v85
    %v88 = vsel %vm50, 1, 0
    %v89 = vsel %vm51, 1, 0
    %v90 = vcvt.s32.f32 %v88
    %v91 = vcvt.s32.f32 %v89
    %v92 = vadd.f32 %v90, %v91
    %v93 = vadd.f32 %v92, 0.0
    %v94 = vsel %vm52, 1, 0
    %v95 = vsel %vm53, 1, 0
    %v96 = vcvt.s32.f32 %v94
    %v97 = vcvt.s32.f32 %v95
    %v98 = vadd.f32 %v96, %v97
    %v99 = vadd.f32 %v98, 0.0
    %v100 = vsel %vm50, %v86, 0.0
    %v101 = vsel %vm51, %v87, 0.0
    %v102 = vadd.f32 %v100, %v101
    %v103 = vadd.f32 %v102, 0.0
    %v104 = vsel %vm52, %v86, 0.0
    %v105 = vsel %vm53, %v87, 0.0
    %v106 = vadd.f32 %v104, %v105
    %v107 = vadd.f32 %v106, 0.0
    %108 = vst [vmem:[#allocation7] sm:$0xff] %v93
    %109 = vst [vmem:[#allocation8] sm:$0xff] %v99
    %110 = vst [vmem:[#allocation10] sm:$0xff] %v103
    %111 = vst [vmem:[#allocation11] sm:$0xff] %v107
    // Predicated region
    $region18: #{tpu_custom_call.1} parent=1 // pred_check
      _
    $region19: #{tpu_custom_call.1} parent=1 // pred_check_branch
      %113 = sbr.rel (0) target = $region21
    $region20: #{tpu_custom_call.1} parent=1 // pred_region
      %s115 = ssub.s32 128, 128
      %116 = vsyncadd [#allocation4], %s115
      %s118 = sshll.u32 [#allocation7], 4
      %s119 = int_to_ptr.vmem [resolvable:$true] %s118
      %121 = dma.vmem_to_hbm [thread:$0]  %s119, 128, %s2, [#allocation4]
    $region21: #{tpu_custom_call.1} parent=1 // pred_fallthru
      _
    // Predicated region
    $region22: #{tpu_custom_call.1} parent=1 // pred_check
      _
    $region23: #{tpu_custom_call.1} parent=1 // pred_check_branch
      %123 = sbr.rel (0) target = $region25
    $region24: #{tpu_custom_call.1} parent=1 // pred_region
      %s125 = ssub.s32 128, 128
      %126 = vsyncadd [#allocation9], %s125
      %s128 = sshll.u32 [#allocation8], 4
      %s129 = int_to_ptr.vmem [resolvable:$true] %s128
      %131 = dma.vmem_to_hbm [thread:$0]  %s129, 128, %s3, [#allocation9]
    $region25: #{tpu_custom_call.1} parent=1 // pred_fallthru
      _
    // Predicated region
    $region26: #{tpu_custom_call.1} parent=1 // pred_check
      _
    $region27: #{tpu_custom_call.1} parent=1 // pred_check_branch
      %133 = sbr.rel (0) target = $region29
    $region28: #{tpu_custom_call.1} parent=1 // pred_region
      %s135 = ssub.s32 128, 128
      %136 = vsyncadd [#allocation9], %s135
      %s138 = sshll.u32 [#allocation10], 4
      %s139 = int_to_ptr.vmem [resolvable:$true] %s138
      %141 = dma.vmem_to_hbm [thread:$0]  %s139, 128, %s4, [#allocation9]
    $region29: #{tpu_custom_call.1} parent=1 // pred_fallthru
      _
    // Predicated region
    $region30: #{tpu_custom_call.1} parent=1 // pred_check
      _
    $region31: #{tpu_custom_call.1} parent=1 // pred_check_branch
      %143 = sbr.rel (0) target = $region33
    $region32: #{tpu_custom_call.1} parent=1 // pred_region
      %s145 = ssub.s32 128, 128
      %146 = vsyncadd [#allocation12], %s145
      %s148 = sshll.u32 [#allocation11], 4
      %s149 = int_to_ptr.vmem [resolvable:$true] %s148
      %151 = dma.vmem_to_hbm [thread:$0]  %s149, 128, %s5, [#allocation12]
    $region33: #{tpu_custom_call.1} parent=1 // pred_fallthru
      _
    // Predicated region
    $region34: #{tpu_custom_call.1} parent=1 // pred_check
      _
    $region35: #{tpu_custom_call.1} parent=1 // pred_check_branch
      %153 = sbr.rel (0) target = $region37
    $region36: #{tpu_custom_call.1} parent=1 // pred_region
      %154 = dma.done [#allocation4], 128
    $region37: #{tpu_custom_call.1} parent=1 // pred_fallthru
      _
    // Predicated region
    $region38: #{tpu_custom_call.1} parent=1 // pred_check
      _
    $region39: #{tpu_custom_call.1} parent=1 // pred_check_branch
      %156 = sbr.rel (0) target = $region41
    $region40: #{tpu_custom_call.1} parent=1 // pred_region
      %157 = dma.done [#allocation9], 128
    $region41: #{tpu_custom_call.1} parent=1 // pred_fallthru
      _
    // Predicated region
    $region42: #{tpu_custom_call.1} parent=1 // pred_check
      _
    $region43: #{tpu_custom_call.1} parent=1 // pred_check_branch
      %159 = sbr.rel (0) target = $region45
    $region44: #{tpu_custom_call.1} parent=1 // pred_region
      %160 = dma.done [#allocation9], 128
    $region45: #{tpu_custom_call.1} parent=1 // pred_fallthru
      _
    // Predicated region
    $region46: #{tpu_custom_call.1} parent=1 // pred_check
      _
    $region47: #{tpu_custom_call.1} parent=1 // pred_check_branch
      %162 = sbr.rel (0) target = $region49
    $region48: #{tpu_custom_call.1} parent=1 // pred_region
      %163 = dma.done [#allocation12], 128
    $region49: #{tpu_custom_call.1} parent=1 // pred_fallthru
      _
    %164 = vsyncpa [#allocation3], 1
    %165 = vsyncpa [#allocation6], 1
    %166 = vsyncpa [#allocation4], 1
    %167 = vsyncpa [#allocation9], 1
    %168 = vsyncpa [#allocation12], 1

</llo_original>
